<compile_context>
chip_gen: v6e
topology: v6e:2x2x1
jax: 0.10.0
libtpu: 0.0.40
codegen_flags: <defaults>
</compile_context>

<pallas_src>
import jax
import jax.numpy as jnp
from jax.experimental import pallas as pl
from jax.experimental.pallas import tpu as pltpu


_LANE = 128      # lane width (last-dim tiling unit)
_SUBLANE = 8     # sublane width (second-to-last-dim tiling unit)


def _round_up(x, m):
    return ((x + m - 1) // m) * m


def _traj_pred_mlp_kernel(x_ref, w1_ref, lnp_ref, w2_ref, b2_ref, o_ref):
    # Fused hot path: matmul -> layernorm -> relu -> matmul, all in VMEM.
    # x_ref / w1_ref / w2_ref are bf16 (MXU-native); accumulation + LN in f32.
    x = x_ref[...]                                                    # (tile_n, in_c) bf16

    # Linear 1 (f32 accumulate) + bias
    h = jnp.dot(x, w1_ref[...], preferred_element_type=jnp.float32)  # (tile_n, hidden) f32
    ln = lnp_ref[...]                                                 # (3, hidden) f32
    h = h + ln[0:1, :]                                                # b1

    # LayerNorm over last dim (PyTorch default: biased var, eps=1e-5, affine)
    mean = jnp.mean(h, axis=-1, keepdims=True)
    var = jnp.mean(jnp.square(h - mean), axis=-1, keepdims=True)
    h = (h - mean) * jax.lax.rsqrt(var + 1e-5)
    h = h * ln[1:2, :] + ln[2:3, :]                                   # gamma, beta

    # ReLU
    h = jnp.maximum(h, 0.0)

    # Linear 2 (bf16 inputs, f32 accumulate) + bias; output block is lane-dense (128-wide)
    out = jnp.dot(h.astype(w2_ref.dtype), w2_ref[...],
                  preferred_element_type=jnp.float32) + b2_ref[...]
    o_ref[...] = out.astype(o_ref.dtype)


def traj_pred_mlp(x, w1, b1, gamma, beta, w2, b2, *, tile_n=1024):
    """x: (..., in_channels); returns (..., out_channels).

    Weights are stored pre-transposed relative to torch: w1 (in, hidden), w2 (hidden, out).
    """
    orig_dtype = x.dtype
    lead = x.shape[:-1]
    in_c = x.shape[-1]
    hidden = w1.shape[1]
    out_c = w2.shape[1]

    x2 = x.reshape(-1, in_c)
    N = x2.shape[0]

    # Row tile: multiple of 8 sublanes; don't over-pad tiny inputs.
    tile_n = max(_SUBLANE, (min(tile_n, _round_up(N, _SUBLANE)) // _SUBLANE) * _SUBLANE)
    grid_n = pl.cdiv(N, tile_n)
    n_pad = grid_n * tile_n

    # Lane-dense output feature dim (multiple of 128); padding sliced off below.
    out_p = _round_up(out_c, _LANE)

    # Pad / cast operands (bf16 for MXU inputs, f32 for bias / LN params).
    x_b = x2.astype(jnp.bfloat16)
    if n_pad != N:
        x_p = jnp.zeros((n_pad, in_c), jnp.bfloat16).at[:N].set(x_b)
    else:
        x_p = x_b
    w1_b = w1.astype(jnp.bfloat16)
    w2_p = jnp.zeros((hidden, out_p), jnp.bfloat16).at[:, :out_c].set(w2.astype(jnp.bfloat16))
    b2_p = jnp.zeros((1, out_p), jnp.float32).at[:, :out_c].set(b2.astype(jnp.float32))
    ln_params = jnp.concatenate(
        [b1.astype(jnp.float32), gamma.astype(jnp.float32), beta.astype(jnp.float32)],
        axis=0)                                                       # (3, hidden)

    out = pl.pallas_call(
        _traj_pred_mlp_kernel,
        out_shape=jax.ShapeDtypeStruct((n_pad, out_p), jnp.float32),
        grid_spec=pltpu.PrefetchScalarGridSpec(
            num_scalar_prefetch=0,
            grid=(grid_n,),
            in_specs=[
                pl.BlockSpec((tile_n, in_c), lambda i: (i, 0)),    # x rows (streamed)
                pl.BlockSpec((in_c, hidden), lambda i: (0, 0)),    # W1 (resident)
                pl.BlockSpec((3, hidden), lambda i: (0, 0)),       # [b1; gamma; beta]
                pl.BlockSpec((hidden, out_p), lambda i: (0, 0)),   # W2 (resident, lane-padded)
                pl.BlockSpec((1, out_p), lambda i: (0, 0)),        # b2 (lane-padded)
            ],
            out_specs=pl.BlockSpec((tile_n, out_p), lambda i: (i, 0)),
        ),
        compiler_params=pltpu.CompilerParams(
            dimension_semantics=("parallel",)),  # megacore sharding on v7x
    )(x_p, w1_b, ln_params, w2_p, b2_p)

    out = out[:N, :out_c].astype(orig_dtype)
    return out.reshape(*lead, out_c)


def init_params(key, in_channels, out_channels, hidden_unit, dtype=jnp.float32):
    """Deterministic synthetic init (mimics shapes from the nn.Module __init__)."""
    k1, k2, k3, k4 = jax.random.split(key, 4)
    # Stored transposed relative to torch's (out, in): here (in, out).
    w1 = jax.random.normal(k1, (in_channels, hidden_unit), dtype) * (1.0 / jnp.sqrt(in_channels))
    b1 = jax.random.normal(k2, (1, hidden_unit), dtype) * 0.01
    gamma = jnp.ones((1, hidden_unit), dtype)
    beta = jnp.zeros((1, hidden_unit), dtype)
    w2 = jax.random.normal(k3, (hidden_unit, out_channels), dtype) * (1.0 / jnp.sqrt(hidden_unit))
    b2 = jax.random.normal(k4, (1, out_channels), dtype) * 0.01
    return w1, b1, gamma, beta, w2, b2


def reference_mlp(x, w1, b1, gamma, beta, w2, b2):
    """Plain-JAX f32 reference matching torch semantics (for correctness check)."""
    h = x @ w1 + b1
    mean = jnp.mean(h, axis=-1, keepdims=True)
    var = jnp.mean(jnp.square(h - mean), axis=-1, keepdims=True)
    h = (h - mean) / jnp.sqrt(var + 1e-5)
    h = h * gamma + beta
    h = jnp.maximum(h, 0.0)
    return h @ w2 + b2


if __name__ == "__main__":
    key = jax.random.PRNGKey(0)
    in_channels, out_channels, hidden_unit = 16, 30, 32
    batch, seq = 2, 8

    kx, kp = jax.random.split(key)
    x = jax.random.normal(kx, (batch, seq, in_channels), jnp.float32)
    params = init_params(kp, in_channels, out_channels, hidden_unit)

    out = traj_pred_mlp(x, *params)
    out = jax.block_until_ready(out)

    ref = reference_mlp(x, *params)
    assert out.shape == (batch, seq, out_channels)
    # Kernel matmuls run in bf16 (f32 accumulate); reference is pure f32 -> loosened tolerance.
    assert jnp.allclose(out, ref, atol=5e-2, rtol=5e-2), "mismatch vs reference"

    print("KERNEL_OK")
</pallas_src>

<mosaic_0001>
module attributes {stable_mosaic.version = 11 : i64} {
  func.func @_traj_pred_mlp_kernel(%arg0: i32, %arg1: memref<16x16xbf16, #tpu.memory_space<vmem>>, %arg2: memref<16x32xbf16, #tpu.memory_space<vmem>>, %arg3: memref<3x32xf32, #tpu.memory_space<vmem>>, %arg4: memref<32x128xbf16, #tpu.memory_space<vmem>>, %arg5: memref<1x128xf32, #tpu.memory_space<vmem>>, %arg6: memref<16x128xf32, #tpu.memory_space<vmem>>) attributes {dimension_semantics = [#tpu.dimension_semantics<parallel>], iteration_bounds = array<i64: 1>, scalar_prefetch = 0 : i64, scratch_operands = 0 : i64, tpu.core_type = #tpu.core_type<tc>, window_params = [{transform_indices = @transform_0, window_bounds = array<i64: 16, 16>}, {pipeline_mode = #tpu.pipeline_mode<synchronous>, transform_indices = @transform_1, window_bounds = array<i64: 16, 32>}, {pipeline_mode = #tpu.pipeline_mode<synchronous>, transform_indices = @transform_2, window_bounds = array<i64: 3, 32>}, {pipeline_mode = #tpu.pipeline_mode<synchronous>, transform_indices = @transform_3, window_bounds = array<i64: 32, 128>}, {pipeline_mode = #tpu.pipeline_mode<synchronous>, transform_indices = @transform_4, window_bounds = array<i64: 1, 128>}, {transform_indices = @transform_5, window_bounds = array<i64: 16, 128>}]} {
    %c0 = arith.constant 0 : index
    %c0_0 = arith.constant 0 : index
    %0 = vector.load %arg1[%c0, %c0_0] : memref<16x16xbf16, #tpu.memory_space<vmem>>, vector<16x16xbf16>
    %c0_1 = arith.constant 0 : index
    %c0_2 = arith.constant 0 : index
    %1 = vector.load %arg2[%c0_1, %c0_2] : memref<16x32xbf16, #tpu.memory_space<vmem>>, vector<16x32xbf16>
    %cst = arith.constant dense<0.000000e+00> : vector<16x32xf32>
    %2 = tpu.matmul %0, %1, %cst {dimension_numbers = #tpu.dot_dimension_numbers<[1], [0], [0], [1], [0, 0, 1, 1], [], []>} : vector<16x16xbf16>, vector<16x32xbf16>, vector<16x32xf32> -> vector<16x32xf32>
    %c0_3 = arith.constant 0 : index
    %c0_4 = arith.constant 0 : index
    %3 = vector.load %arg3[%c0_3, %c0_4] : memref<3x32xf32, #tpu.memory_space<vmem>>, vector<3x32xf32>
    %4 = vector.extract_strided_slice %3 {offsets = [0, 0], sizes = [1, 32], strides = [1, 1]} : vector<3x32xf32> to vector<1x32xf32>
    %5 = vector.broadcast %4 : vector<1x32xf32> to vector<16x32xf32>
    %6 = arith.addf %2, %5 : vector<16x32xf32>
    %cst_5 = arith.constant dense<0.000000e+00> : vector<16xf32>
    %7 = vector.multi_reduction <add>, %6, %cst_5 [1] : vector<16x32xf32> to vector<16xf32>
    %8 = vector.shape_cast %7 : vector<16xf32> to vector<16x1xf32>
    %cst_6 = arith.constant 3.200000e+01 : f32
    %9 = vector.broadcast %cst_6 : f32 to vector<16x1xf32>
    %10 = arith.divf %8, %9 : vector<16x1xf32>
    %11 = vector.broadcast %10 : vector<16x1xf32> to vector<16x32xf32>
    %12 = arith.subf %6, %11 : vector<16x32xf32>
    %13 = arith.mulf %12, %12 : vector<16x32xf32>
    %cst_7 = arith.constant dense<0.000000e+00> : vector<16xf32>
    %14 = vector.multi_reduction <add>, %13, %cst_7 [1] : vector<16x32xf32> to vector<16xf32>
    %15 = vector.shape_cast %14 : vector<16xf32> to vector<16x1xf32>
    %cst_8 = arith.constant 3.200000e+01 : f32
    %16 = vector.broadcast %cst_8 : f32 to vector<16x1xf32>
    %17 = arith.divf %15, %16 : vector<16x1xf32>
    %18 = vector.broadcast %10 : vector<16x1xf32> to vector<16x32xf32>
    %19 = arith.subf %6, %18 : vector<16x32xf32>
    %cst_9 = arith.constant 9.99999974E-6 : f32
    %20 = vector.broadcast %cst_9 : f32 to vector<16x1xf32>
    %21 = arith.addf %17, %20 : vector<16x1xf32>
    %22 = math.rsqrt %21 : vector<16x1xf32>
    %23 = vector.broadcast %22 : vector<16x1xf32> to vector<16x32xf32>
    %24 = arith.mulf %19, %23 : vector<16x32xf32>
    %25 = vector.extract_strided_slice %3 {offsets = [1, 0], sizes = [1, 32], strides = [1, 1]} : vector<3x32xf32> to vector<1x32xf32>
    %26 = vector.broadcast %25 : vector<1x32xf32> to vector<16x32xf32>
    %27 = arith.mulf %24, %26 : vector<16x32xf32>
    %28 = vector.extract_strided_slice %3 {offsets = [2, 0], sizes = [1, 32], strides = [1, 1]} : vector<3x32xf32> to vector<1x32xf32>
    %29 = vector.broadcast %28 : vector<1x32xf32> to vector<16x32xf32>
    %30 = arith.addf %27, %29 : vector<16x32xf32>
    %cst_10 = arith.constant 0.000000e+00 : f32
    %31 = vector.broadcast %cst_10 : f32 to vector<16x32xf32>
    %32 = arith.maximumf %30, %31 : vector<16x32xf32>
    %33 = arith.truncf %32 : vector<16x32xf32> to vector<16x32xbf16>
    %c0_11 = arith.constant 0 : index
    %c0_12 = arith.constant 0 : index
    %34 = vector.load %arg4[%c0_11, %c0_12] : memref<32x128xbf16, #tpu.memory_space<vmem>>, vector<32x128xbf16>
    %cst_13 = arith.constant dense<0.000000e+00> : vector<16x128xf32>
    %35 = tpu.matmul %33, %34, %cst_13 {dimension_numbers = #tpu.dot_dimension_numbers<[1], [0], [0], [1], [0, 0, 1, 1], [], []>} : vector<16x32xbf16>, vector<32x128xbf16>, vector<16x128xf32> -> vector<16x128xf32>
    %c0_14 = arith.constant 0 : index
    %c0_15 = arith.constant 0 : index
    %36 = vector.load %arg5[%c0_14, %c0_15] : memref<1x128xf32, #tpu.memory_space<vmem>>, vector<1x128xf32>
    %37 = vector.broadcast %36 : vector<1x128xf32> to vector<16x128xf32>
    %38 = arith.addf %35, %37 : vector<16x128xf32>
    %c0_16 = arith.constant 0 : index
    %c0_17 = arith.constant 0 : index
    %39 = vector.load %arg6[%c0_16, %c0_17] : memref<16x128xf32, #tpu.memory_space<vmem>>, vector<16x128xf32>
    tpu.vector_store %arg6[%c0_16, %c0_17], %38 {strides = array<i32>} : memref<16x128xf32, #tpu.memory_space<vmem>>, vector<16x128xf32>,
    return
  }
  func.func @transform_0(%arg0: i32) -> (i32, i32) {
    %c0_i32 = arith.constant 0 : i32
    %c0_i32_0 = arith.constant 0 : i32
    return %arg0, %c0_i32 : i32, i32
  }
  func.func @transform_1(%arg0: i32) -> (i32, i32) {
    %c0_i32 = arith.constant 0 : i32
    %c0_i32_0 = arith.constant 0 : i32
    %c0_i32_1 = arith.constant 0 : i32
    return %c0_i32, %c0_i32_0 : i32, i32
  }
  func.func @transform_2(%arg0: i32) -> (i32, i32) {
    %c0_i32 = arith.constant 0 : i32
    %c0_i32_0 = arith.constant 0 : i32
    %c0_i32_1 = arith.constant 0 : i32
    return %c0_i32, %c0_i32_0 : i32, i32
  }
  func.func @transform_3(%arg0: i32) -> (i32, i32) {
    %c0_i32 = arith.constant 0 : i32
    %c0_i32_0 = arith.constant 0 : i32
    %c0_i32_1 = arith.constant 0 : i32
    return %c0_i32, %c0_i32_0 : i32, i32
  }
  func.func @transform_4(%arg0: i32) -> (i32, i32) {
    %c0_i32 = arith.constant 0 : i32
    %c0_i32_0 = arith.constant 0 : i32
    %c0_i32_1 = arith.constant 0 : i32
    return %c0_i32, %c0_i32_0 : i32, i32
  }
  func.func @transform_5(%arg0: i32) -> (i32, i32) {
    %c0_i32 = arith.constant 0 : i32
    %c0_i32_0 = arith.constant 0 : i32
    return %arg0, %c0_i32 : i32, i32
  }
}

</mosaic_0001>

<llo_original>
// kernel: tpu_custom_call.1
$region0: #{tpu_custom_call.1}
  #allocation0 [shape = 'u32[]', space=smem, size = 0x4, offset = 0x4, fixed_abs, tag = 'smem constant byte address 0x4 - core index']
  #allocation1 [shape = 'u32[144,128]{1,0:T(1,128)}', space=vmem, size = 0x12000, scoped, tag = 'internal scratch']
  %s0 = inlined_call_operand.hbm [shape: bf16[16,16], index: 0, kind: input, shape index: {}]
  %s1 = inlined_call_operand.hbm [shape: bf16[16,32], index: 1, kind: input, shape index: {}]
  %s2 = inlined_call_operand.hbm [shape: f32[3,32], index: 2, kind: input, shape index: {}]
  %s3 = inlined_call_operand.hbm [shape: bf16[32,128], index: 3, kind: input, shape index: {}]
  %s4 = inlined_call_operand.vmem [shape: f32[1,128], index: 4, kind: input, shape index: {}]
  %s5 = inlined_call_operand.hbm [shape: f32[16,128], index: 5, kind: output, shape index: {}]
  %s6 = sld [smem:[#allocation0]]
  $region46: #{tpu_custom_call.1} parent=0
    _
  %s8 = ssub.s32 1, %s6
  %s9 = scalar_select 0, %s8, %s6
  $region1: #{tpu_custom_call.1} parent=0
    #allocation2 [shape = 'u8[4096]{0}', space=vmem, size = 0x1000, scoped, tag = 'input window, operand 0, single buffered']
    #allocation3 [shape = 's32[1]{0}', space=sflag, size = 0x4, scoped, tag = 'scoped memory for tpu_custom_call.1']
    #allocation4 [shape = 's32[1]{0}', space=sflag, size = 0x4, scoped, tag = 'scoped memory for tpu_custom_call.1']
    #allocation5 [shape = 'u8[4096]{0}', space=vmem, size = 0x1000, scoped, tag = 'input window, operand 1, single buffered']
    #allocation6 [shape = 's32[1]{0}', space=sflag, size = 0x4, scoped, tag = 'scoped memory for tpu_custom_call.1']
    #allocation7 [shape = 'u8[2048]{0}', space=vmem, size = 0x800, scoped, tag = 'input window, operand 2, single buffered']
    #allocation8 [shape = 'u8[8192]{0}', space=vmem, size = 0x2000, scoped, tag = 'input window, operand 3, single buffered']
    #allocation9 [shape = 's32[1]{0}', space=sflag, size = 0x4, scoped, tag = 'scoped memory for tpu_custom_call.1']
    #allocation10 [shape = 'u8[8192]{0}', space=vmem, size = 0x2000, scoped, tag = 'output window, operand 0, single buffered']
    %10 = vsyncpa [#allocation3], 0
    %11 = vsyncpa [#allocation6], 0
    %12 = vsyncpa [#allocation9], 0
    %13 = vsyncpa [#allocation4], 0
    // Predicated region
    $region2: #{tpu_custom_call.1} parent=1 // pred_check
      _
    $region3: #{tpu_custom_call.1} parent=1 // pred_check_branch
      %15 = sbr.rel (0) target = $region5
    $region4: #{tpu_custom_call.1} parent=1 // pred_region
      %s17 = ssub.s32 128, 128
      %18 = vsyncadd [#allocation3], %s17
      %s19 = sshll.u32 [#allocation2], 4
      %s20 = int_to_ptr.vmem [resolvable:$true] %s19
      %25 = dma.hbm_to_vmem [thread:$0]  %s0, 128, %s20, [#allocation3], 64, 64, 4
    $region5: #{tpu_custom_call.1} parent=1 // pred_fallthru
      _
    // Predicated region
    $region6: #{tpu_custom_call.1} parent=1 // pred_check
      _
    $region7: #{tpu_custom_call.1} parent=1 // pred_check_branch
      %27 = sbr.rel (0) target = $region9
    $region8: #{tpu_custom_call.1} parent=1 // pred_region
      %s29 = ssub.s32 128, 128
      %30 = vsyncadd [#allocation6], %s29
      %s31 = sshll.u32 [#allocation5], 4
      %s32 = int_to_ptr.vmem [resolvable:$true] %s31
      %37 = dma.hbm_to_vmem [thread:$0]  %s1, 128, %s32, [#allocation6], 64, 64, 4
    $region9: #{tpu_custom_call.1} parent=1 // pred_fallthru
      _
    // Predicated region
    $region10: #{tpu_custom_call.1} parent=1 // pred_check
      _
    $region11: #{tpu_custom_call.1} parent=1 // pred_check_branch
      %39 = sbr.rel (0) target = $region13
    $region12: #{tpu_custom_call.1} parent=1 // pred_region
      %s41 = ssub.s32 64, 64
      %42 = vsyncadd [#allocation6], %s41
      %s44 = sshll.u32 [#allocation7], 4
      %s45 = int_to_ptr.vmem [resolvable:$true] %s44
      %47 = dma.hbm_to_vmem [thread:$0]  %s2, 64, %s45, [#allocation6]
    $region13: #{tpu_custom_call.1} parent=1 // pred_fallthru
      _
    // Predicated region
    $region14: #{tpu_custom_call.1} parent=1 // pred_check
      _
    $region15: #{tpu_custom_call.1} parent=1 // pred_check_branch
      %49 = sbr.rel (0) target = $region17
    $region16: #{tpu_custom_call.1} parent=1 // pred_region
      %s51 = ssub.s32 256, 256
      %52 = vsyncadd [#allocation9], %s51
      %s53 = sshll.u32 [#allocation8], 4
      %s54 = int_to_ptr.vmem [resolvable:$true] %s53
      %59 = dma.hbm_to_vmem [thread:$0]  %s3, 256, %s54, [#allocation9], 64, 64, 4
    $region17: #{tpu_custom_call.1} parent=1 // pred_fallthru
      _
    // Predicated region
    $region18: #{tpu_custom_call.1} parent=1 // pred_check
      _
    $region19: #{tpu_custom_call.1} parent=1 // pred_check_branch
      %61 = sbr.rel (0) target = $region21
    $region20: #{tpu_custom_call.1} parent=1 // pred_region
      _
    $region21: #{tpu_custom_call.1} parent=1 // pred_fallthru
      _
    // Predicated region
    $region22: #{tpu_custom_call.1} parent=1 // pred_check
      _
    $region23: #{tpu_custom_call.1} parent=1 // pred_check_branch
      %63 = sbr.rel (0) target = $region25
    $region24: #{tpu_custom_call.1} parent=1 // pred_region
      %64 = dma.done [#allocation3], 128
    $region25: #{tpu_custom_call.1} parent=1 // pred_fallthru
      _
    // Predicated region
    $region26: #{tpu_custom_call.1} parent=1 // pred_check
      _
    $region27: #{tpu_custom_call.1} parent=1 // pred_check_branch
      %66 = sbr.rel (0) target = $region29
    $region28: #{tpu_custom_call.1} parent=1 // pred_region
      %67 = dma.done [#allocation6], 128
    $region29: #{tpu_custom_call.1} parent=1 // pred_fallthru
      _
    // Predicated region
    $region30: #{tpu_custom_call.1} parent=1 // pred_check
      _
    $region31: #{tpu_custom_call.1} parent=1 // pred_check_branch
      %69 = sbr.rel (0) target = $region33
    $region32: #{tpu_custom_call.1} parent=1 // pred_region
      %70 = dma.done [#allocation6], 64
    $region33: #{tpu_custom_call.1} parent=1 // pred_fallthru
      _
    // Predicated region
    $region34: #{tpu_custom_call.1} parent=1 // pred_check
      _
    $region35: #{tpu_custom_call.1} parent=1 // pred_check_branch
      %72 = sbr.rel (0) target = $region37
    $region36: #{tpu_custom_call.1} parent=1 // pred_region
      %73 = dma.done [#allocation9], 256
    $region37: #{tpu_custom_call.1} parent=1 // pred_fallthru
      _
    %v75 = vld [vmem:[#allocation2] sm:$0xf]
    %v76 = vld [vmem:[#allocation2 + $0x4] sm:$0xf]
    %v77 = vld [vmem:[#allocation5] sm:$0xf]
    %v78 = vld [vmem:[#allocation5 + $0x4] sm:$0xf]
    %v79 = vld [vmem:[#allocation7] sm:$0x7]
    %v80 = vlaneseq
    %v81 = vshrl.u32 %v80, 7
    %v82 = vsub.s32 0, %v81
    %v83 = vrot.slane %v79, %v82
    %v86 = vunpack.c.l.b16 %v75
    %v87 = vunpack.c.l.b16 %v76
    %v88 = vpack.c.b16 %v87, %v86
    %v91 = vunpack.c.l.b16 %v77
    %v92 = vunpack.c.l.b16 %v78
    %v93 = vpack.c.b16 %v92, %v91
    %vm95 = vcmask 130048
    %v97 = vsel %vm95, %v88, 0
    %99 = vmatprep.subr.bf16.mxu0 0
    %100 = vmatpush1.bf16.msra.mxu0 0
    %101 = vmatprep.subr.bf16.mxu0 0
    %102 = vmatpush1.bf16.msra.mxu0 0
    %103 = vmatprep.subr.bf16.mxu0 0
    %104 = vmatpush1.bf16.msra.mxu0 0
    %105 = vmatprep.subr.bf16.mxu0 0
    %106 = vmatpush1.bf16.msra.mxu0 0
    %107 = vmatprep.subr.bf16.mxu0 0
    %108 = vmatpush1.bf16.msra.mxu0 0
    %109 = vmatprep.subr.bf16.mxu0 0
    %110 = vmatpush1.bf16.msra.mxu0 0
    %111 = vmatprep.subr.bf16.mxu0 0
    %112 = vmatpush1.bf16.msra.mxu0 0
    %113 = vmatprep.subr.bf16.mxu0 0
    %114 = vmatpush1.bf16.msra.mxu0 %v93
    %115 = vmatprep.subr.bf16.mxu0 0
    %116 = vmatpush2.bf16.msra.mxu0 0
    %117 = vmatprep.subr.bf16.mxu0 0
    %118 = vmatpush2.bf16.msra.mxu0 0
    %119 = vmatprep.subr.bf16.mxu0 0
    %120 = vmatpush2.bf16.msra.mxu0 0
    %121 = vmatprep.subr.bf16.mxu0 0
    %122 = vmatpush2.bf16.msra.mxu0 0
    %123 = vmatprep.subr.bf16.mxu0 0
    %124 = vmatpush2.bf16.msra.mxu0 0
    %125 = vmatprep.subr.bf16.mxu0 0
    %126 = vmatpush2.bf16.msra.mxu0 0
    %127 = vmatprep.subr.bf16.mxu0 0
    %128 = vmatpush2.bf16.msra.mxu0 0
    %129 = vmatprep.subr.bf16.mxu0 0
    %130 = vmatpush2.bf16.msra.mxu0 0
    %131 = vmatprep.mubr.bf16.mxu0 0
    %132 = vmatmul.mubr.bf16.gmra.mxu0 %v97
    %v133 = vpop.f32.mrf.mxu0
    %v134 = vadd.f32 %v83, %v133
    %v135 = vpop.f32.mrf.mxu0
    %v136 = vpop.f32.mrf.mxu0
    %v137 = vadd.f32 %v83, %v136
    %v138 = vpop.f32.mrf.mxu0
    %139 = vdwg.mxu0
    %vm140 = vcmask 261120
    %v141 = vsel %vm140, %v134, 0.0
    %142 = vadd.xlane.f32.xlu0 %v141
    %v143 = vpop.xlane.xlu0 %142
    %v144 = vsel %vm140, %v137, 0.0
    %145 = vadd.xlane.f32.xlu0 %v144
    %v146 = vpop.xlane.xlu0 %145
    %v147 = vrcp.pop 32.0
    %v148 = vmul.f32 %v143, %v147
    %v149 = vmul.f32 %v146, %v147
    %v150 = vsub.f32 %v134, %v148
    %v151 = vsub.f32 %v137, %v149
    %v152 = vmul.f32 %v150, %v150
    %v153 = vmul.f32 %v151, %v151
    %v154 = vsel %vm140, %v152, 0.0
    %155 = vadd.xlane.f32.xlu0 %v154
    %v156 = vpop.xlane.xlu0 %155
    %v157 = vsel %vm140, %v153, 0.0
    %158 = vadd.xlane.f32.xlu0 %v157
    %v159 = vpop.xlane.xlu0 %158
    %v160 = vmul.f32 %v156, %v147
    %v161 = vmul.f32 %v159, %v147
    %v162 = vadd.f32 %v160, 1e-05
    %v163 = vadd.f32 %v161, 1e-05
    %v164 = vrsqrt.pop %v162
    %v165 = vrsqrt.pop %v163
    %v166 = vmul.f32 %v150, %v164
    %v167 = vmul.f32 %v151, %v165
    %v168 = vlaneseq
    %v169 = vshrl.u32 %v168, 7
    %v170 = vsub.s32 1, %v169
    %v171 = vrot.slane %v79, %v170
    %v172 = vmul.f32 %v166, %v171
    %v173 = vmul.f32 %v167, %v171
    %v174 = vlaneseq
    %v175 = vshrl.u32 %v174, 7
    %v176 = vsub.s32 2, %v175
    %v177 = vrot.slane %v79, %v176
    %v178 = vadd.f32 %v172, %v177
    %v179 = vadd.f32 %v173, %v177
    %v180 = vmax.f32 %v178, 0.0
    %v181 = vmax.f32 %v179, 0.0
    %v182 = vpack.c.bf16 %v181, %v180
    %v183 = vld [vmem:[#allocation8] sm:$0xf]
    %v184 = vld [vmem:[#allocation8 + $0x4] sm:$0xf]
    %v185 = vld [vmem:[#allocation8 + $0x8] sm:$0xf]
    %v186 = vld [vmem:[#allocation8 + $0xc] sm:$0xf]
    %v187 = vld [vmem:[%s4] sm:$0x1]
    %v189 = vlaneseq
    %v190 = vshrl.u32 %v189, 7
    %v191 = vsub.s32 0, %v190
    %v192 = vrot.slane %v187, %v191
    %v198 = vunpack.c.l.b16 %v183
    %v199 = vunpack.c.l.b16 %v184
    %v200 = vunpack.c.l.b16 %v185
    %v201 = vunpack.c.l.b16 %v186
    %v202 = vpack.c.b16 %v199, %v198
    %v203 = vpack.c.b16 %v201, %v200
    %v207 = vsel %vm140, %v182, 0
    %209 = vmatprep.subr.bf16.mxu0 0
    %210 = vmatpush1.bf16.msra.mxu0 0
    %211 = vmatprep.subr.bf16.mxu0 0
    %212 = vmatpush1.bf16.msra.mxu0 0
    %213 = vmatprep.subr.bf16.mxu0 0
    %214 = vmatpush1.bf16.msra.mxu0 0
    %215 = vmatprep.subr.bf16.mxu0 0
    %216 = vmatpush1.bf16.msra.mxu0 0
    %217 = vmatprep.subr.bf16.mxu0 0
    %218 = vmatpush1.bf16.msra.mxu0 0
    %219 = vmatprep.subr.bf16.mxu0 0
    %220 = vmatpush1.bf16.msra.mxu0 0
    %221 = vmatprep.subr.bf16.mxu0 0
    %222 = vmatpush1.bf16.msra.mxu0 %v203
    %223 = vmatprep.subr.bf16.mxu0 0
    %224 = vmatpush1.bf16.msra.mxu0 %v202
    %225 = vmatprep.subr.bf16.mxu0 0
    %226 = vmatpush2.bf16.msra.mxu0 0
    %227 = vmatprep.subr.bf16.mxu0 0
    %228 = vmatpush2.bf16.msra.mxu0 0
    %229 = vmatprep.subr.bf16.mxu0 0
    %230 = vmatpush2.bf16.msra.mxu0 0
    %231 = vmatprep.subr.bf16.mxu0 0
    %232 = vmatpush2.bf16.msra.mxu0 0
    %233 = vmatprep.subr.bf16.mxu0 0
    %234 = vmatpush2.bf16.msra.mxu0 0
    %235 = vmatprep.subr.bf16.mxu0 0
    %236 = vmatpush2.bf16.msra.mxu0 0
    %237 = vmatprep.subr.bf16.mxu0 0
    %238 = vmatpush2.bf16.msra.mxu0 0
    %239 = vmatprep.subr.bf16.mxu0 0
    %240 = vmatpush2.bf16.msra.mxu0 0
    %241 = vmatprep.mubr.bf16.mxu0 0
    %242 = vmatmul.mubr.bf16.gmra.mxu0 %v207
    %v243 = vpop.f32.mrf.mxu0
    %v244 = vadd.f32 %v192, %v243
    %v245 = vpop.f32.mrf.mxu0
    %v246 = vpop.f32.mrf.mxu0
    %v247 = vadd.f32 %v192, %v246
    %v248 = vpop.f32.mrf.mxu0
    %249 = vdwg.mxu0
    %250 = vst [vmem:[#allocation10] sm:$0xff] %v244
    %251 = vst [vmem:[#allocation10 + $0x8] sm:$0xff] %v247
    // Predicated region
    $region38: #{tpu_custom_call.1} parent=1 // pred_check
      _
    $region39: #{tpu_custom_call.1} parent=1 // pred_check_branch
      %253 = sbr.rel (0) target = $region41
    $region40: #{tpu_custom_call.1} parent=1 // pred_region
      %s255 = ssub.s32 256, 256
      %256 = vsyncadd [#allocation4], %s255
      %s257 = sshll.u32 [#allocation10], 4
      %s258 = int_to_ptr.vmem [resolvable:$true] %s257
      %263 = dma.vmem_to_hbm [thread:$0]  %s258, 256, %s5, [#allocation4], 128, 128, 8
    $region41: #{tpu_custom_call.1} parent=1 // pred_fallthru
      _
    // Predicated region
    $region42: #{tpu_custom_call.1} parent=1 // pred_check
      _
    $region43: #{tpu_custom_call.1} parent=1 // pred_check_branch
      %265 = sbr.rel (0) target = $region45
    $region44: #{tpu_custom_call.1} parent=1 // pred_region
      %266 = dma.done [#allocation4], 256
    $region45: #{tpu_custom_call.1} parent=1 // pred_fallthru
      _
    %267 = vsyncpa [#allocation3], 1
    %268 = vsyncpa [#allocation6], 1
    %269 = vsyncpa [#allocation9], 1
    %270 = vsyncpa [#allocation4], 1

</llo_original>
